<compile_context>
chip_gen: v5e
topology: v5e:2x2
jax: 0.10.0
libtpu: 0.0.40
codegen_flags: <defaults>
</compile_context>

<pallas_src>
import functools

import jax
import jax.numpy as jnp
from jax.experimental import pallas as pl
from jax.experimental.pallas import tpu as pltpu

LANE = 128  # lane-dense width for the packed parameter slab and the output slab


# ----------------------------------------------------------------------------
# Fused Pallas kernel: 6 GraphConv layers + linear regression head
# ----------------------------------------------------------------------------
def _fused_gcn_kernel(a_ref, h0_ref, w1_ref, wmid_ref, w6_ref, packed_ref,
                      out_ref, *, out_feats):
    a_bf = a_ref[...]                               # (N, N) bf16, DMA'd once, reused 6x
    p = packed_ref[...]                             # (8, 128) f32: biases + head params
    h = h0_ref[...].astype(jnp.float32)             # (N, in_feats)
    hidden = wmid_ref.shape[1]

    def layer(h, w_bf, bias, relu):
        f_in, f_out = w_bf.shape
        h_bf = h.astype(jnp.bfloat16)
        if f_out <= f_in:
            # (H @ W) first: the N^2-side matmul runs over the smaller F_out.
            hw = jnp.dot(h_bf, w_bf, preferred_element_type=jnp.float32)
            out = jnp.dot(a_bf, hw.astype(jnp.bfloat16),
                          preferred_element_type=jnp.float32)
        else:
            # (A_hat @ H) first: the N^2-side matmul runs over the smaller F_in.
            ah = jnp.dot(a_bf, h_bf, preferred_element_type=jnp.float32)
            out = jnp.dot(ah.astype(jnp.bfloat16), w_bf,
                          preferred_element_type=jnp.float32)
        out = out + bias                            # (1, F_out) broadcast over nodes
        if relu:
            out = jnp.maximum(out, 0.0)
        return out

    # Layer 1: in_feats -> hidden
    h = layer(h, w1_ref[...], p[0:1, :hidden], True)
    # Layers 2..5: hidden -> hidden (weights stacked row-wise; static slices)
    for l in range(4):
        w_l = wmid_ref[(l * hidden):((l + 1) * hidden), :]
        h = layer(h, w_l, p[1 + l:2 + l, :hidden], True)
    # Layer 6: hidden -> out_feats, zero-padded to LANE cols, no activation.
    # Columns >= out_feats come out exactly 0 (zero weight cols + zero bias).
    h = layer(h, w6_ref[...], p[5:6, :], False)     # (N, LANE)

    # Regression head (nn.Linear(out_feats, 1)) as VPU multiply + lane reduce.
    # lin_w row is zero-padded beyond out_feats, so the reduction is exact.
    pred = jnp.sum(h * p[6:7, :], axis=-1, keepdims=True) + p[7:8, 0:1]   # (N, 1)

    # Single lane-dense (N, 128) output: cols [0, out_feats) hold H6,
    # cols [out_feats, 128) hold the broadcast prediction.
    col = jax.lax.broadcasted_iota(jnp.int32, out_ref.shape, 1)
    out_ref[...] = jnp.where(col < out_feats, h, pred).astype(out_ref.dtype)


def gcn_regression_forward(a_hat, features, params):
    n = a_hat.shape[0]
    hidden = params["gcn_w"][1].shape[1]
    out_feats = params["gcn_w"][5].shape[1]
    assert out_feats < LANE

    # Host-side bf16 pre-cast of MXU operands (halves A_hat DMA bytes, removes
    # in-kernel converts).  Biases / head stay f32 for f32 VPU math (v5e-safe).
    a_bf = a_hat.astype(jnp.bfloat16)
    w1 = params["gcn_w"][0].astype(jnp.bfloat16)
    w_mid = jnp.concatenate(
        [w.astype(jnp.bfloat16) for w in params["gcn_w"][1:5]], axis=0)  # (4*H, H)
    w6 = jnp.zeros((hidden, LANE), jnp.bfloat16).at[:, :out_feats].set(
        params["gcn_w"][5].astype(jnp.bfloat16))                         # (H, 128)

    # One (8, 128) f32 slab for all 6 biases + lin_w row + lin_b (single DMA).
    packed = jnp.zeros((8, LANE), jnp.float32)
    for l in range(5):
        packed = packed.at[l, :hidden].set(params["gcn_b"][l][0])
    packed = packed.at[5, :out_feats].set(params["gcn_b"][5][0])
    packed = packed.at[6, :out_feats].set(params["lin_w"][:, 0])
    packed = packed.at[7, 0].set(params["lin_b"][0, 0])

    inputs = (a_bf, features, w1, w_mid, w6, packed)
    in_specs = [pl.BlockSpec(x.shape, lambda i: (0, 0)) for x in inputs]

    slab = pl.pallas_call(
        functools.partial(_fused_gcn_kernel, out_feats=out_feats),
        out_shape=jax.ShapeDtypeStruct((n, LANE), jnp.float32),
        grid=(1,),
        in_specs=in_specs,
        out_specs=pl.BlockSpec((n, LANE), lambda i: (0, 0)),
        compiler_params=pltpu.CompilerParams(
            dimension_semantics=("arbitrary",)),
    )(*inputs)

    node_h = slab[:, :out_feats]                    # (N, out_feats)  == H6
    output = slab[:, out_feats:out_feats + 1]       # (N, 1) prediction
    return output, node_h


# ----------------------------------------------------------------------------
# Model: parameter init + graph setup + pure-JAX reference
# ----------------------------------------------------------------------------
def glorot_uniform(key, shape):
    fan_in, fan_out = shape
    limit = jnp.sqrt(6.0 / (fan_in + fan_out))
    return jax.random.uniform(key, shape, jnp.float32, -limit, limit)


def init_params(key, in_feats, hidden_feats, out_feats):
    dims = [
        (in_feats, hidden_feats),
        (hidden_feats, hidden_feats),
        (hidden_feats, hidden_feats),
        (hidden_feats, hidden_feats),
        (hidden_feats, hidden_feats),
        (hidden_feats, out_feats),
    ]
    params = {"gcn_w": [], "gcn_b": []}
    keys = jax.random.split(key, len(dims) + 1)
    for k, (fi, fo) in zip(keys[:-1], dims):
        params["gcn_w"].append(glorot_uniform(k, (fi, fo)))
        params["gcn_b"].append(jnp.zeros((1, fo), jnp.float32))
    # nn.Linear(out_feats, 1)
    klin = keys[-1]
    lim = 1.0 / jnp.sqrt(out_feats)
    params["lin_w"] = jax.random.uniform(klin, (out_feats, 1), jnp.float32, -lim, lim)
    params["lin_b"] = jnp.zeros((1, 1), jnp.float32)
    return params


def build_normalized_adjacency(key, n):
    """Deterministic synthetic graph: random symmetric adjacency + self loops,
    symmetric normalization D^{-1/2} A D^{-1/2} (DGL GraphConv norm='both')."""
    a = (jax.random.uniform(key, (n, n)) < 0.25).astype(jnp.float32)
    a = jnp.maximum(a, a.T)                     # symmetrize
    a = jnp.maximum(a, jnp.eye(n))              # self loops (avoid zero in-degree)
    deg = a.sum(axis=1)
    d_inv_sqrt = 1.0 / jnp.sqrt(deg)
    return (a * d_inv_sqrt[:, None]) * d_inv_sqrt[None, :]


def reference_forward(a_hat, features, params):
    """Pure-JAX f32 reference of the same forward pass."""
    h = features
    for layer in range(6):
        h = a_hat @ h @ params["gcn_w"][layer] + params["gcn_b"][layer]
        if layer < 5:
            h = jnp.maximum(h, 0.0)
    out = h @ params["lin_w"] + params["lin_b"]
    return out, h


# ----------------------------------------------------------------------------
if __name__ == "__main__":
    N = 16            # number of graph nodes
    IN_FEATS = 8
    HIDDEN_FEATS = 32
    OUT_FEATS = 16

    key = jax.random.PRNGKey(0)
    k_graph, k_feat, k_param = jax.random.split(key, 3)

    a_hat = build_normalized_adjacency(k_graph, N)                    # (N, N)
    features = jax.random.normal(k_feat, (N, IN_FEATS), jnp.float32)  # (N, in_feats)
    params = init_params(k_param, IN_FEATS, HIDDEN_FEATS, OUT_FEATS)

    output, node_h = gcn_regression_forward(a_hat, features, params)
    output = jax.block_until_ready(output)
    node_h = jax.block_until_ready(node_h)

    assert output.shape == (N, 1)
    assert node_h.shape == (N, OUT_FEATS)
    assert bool(jnp.all(jnp.isfinite(output)))
    assert bool(jnp.all(jnp.isfinite(node_h)))

    # Loose check against the f32 reference (kernel uses bf16 MXU operands).
    ref_out, ref_h = reference_forward(a_hat, features, params)
    assert bool(jnp.allclose(output, ref_out, rtol=1e-1, atol=1e-1)), "head mismatch"
    assert bool(jnp.allclose(node_h, ref_h, rtol=1e-1, atol=1e-1)), "h6 mismatch"

    print("KERNEL_OK")
</pallas_src>

<mosaic_0001>
module attributes {stable_mosaic.version = 11 : i64} {
  func.func @_fused_gcn_kernel(%arg0: i32, %arg1: memref<16x16xbf16, #tpu.memory_space<vmem>>, %arg2: memref<16x8xf32, #tpu.memory_space<vmem>>, %arg3: memref<8x32xbf16, #tpu.memory_space<vmem>>, %arg4: memref<128x32xbf16, #tpu.memory_space<vmem>>, %arg5: memref<32x128xbf16, #tpu.memory_space<vmem>>, %arg6: memref<8x128xf32, #tpu.memory_space<vmem>>, %arg7: memref<16x128xf32, #tpu.memory_space<vmem>>) attributes {dimension_semantics = [#tpu.dimension_semantics<arbitrary>], iteration_bounds = array<i64: 1>, scalar_prefetch = 0 : i64, scratch_operands = 0 : i64, tpu.core_type = #tpu.core_type<tc>, window_params = [{pipeline_mode = #tpu.pipeline_mode<synchronous>, transform_indices = @transform_0, window_bounds = array<i64: 16, 16>}, {pipeline_mode = #tpu.pipeline_mode<synchronous>, transform_indices = @transform_1, window_bounds = array<i64: 16, 8>}, {pipeline_mode = #tpu.pipeline_mode<synchronous>, transform_indices = @transform_2, window_bounds = array<i64: 8, 32>}, {pipeline_mode = #tpu.pipeline_mode<synchronous>, transform_indices = @transform_3, window_bounds = array<i64: 128, 32>}, {pipeline_mode = #tpu.pipeline_mode<synchronous>, transform_indices = @transform_4, window_bounds = array<i64: 32, 128>}, {pipeline_mode = #tpu.pipeline_mode<synchronous>, transform_indices = @transform_5, window_bounds = array<i64: 8, 128>}, {pipeline_mode = #tpu.pipeline_mode<synchronous>, transform_indices = @transform_6, window_bounds = array<i64: 16, 128>}]} {
    %c0 = arith.constant 0 : index
    %c0_0 = arith.constant 0 : index
    %0 = vector.load %arg1[%c0, %c0_0] : memref<16x16xbf16, #tpu.memory_space<vmem>>, vector<16x16xbf16>
    %c0_1 = arith.constant 0 : index
    %c0_2 = arith.constant 0 : index
    %1 = vector.load %arg6[%c0_1, %c0_2] : memref<8x128xf32, #tpu.memory_space<vmem>>, vector<8x128xf32>
    %c0_3 = arith.constant 0 : index
    %c0_4 = arith.constant 0 : index
    %2 = vector.load %arg2[%c0_3, %c0_4] : memref<16x8xf32, #tpu.memory_space<vmem>>, vector<16x8xf32>
    %c0_5 = arith.constant 0 : index
    %c0_6 = arith.constant 0 : index
    %3 = vector.load %arg3[%c0_5, %c0_6] : memref<8x32xbf16, #tpu.memory_space<vmem>>, vector<8x32xbf16>
    %4 = vector.extract_strided_slice %1 {offsets = [0, 0], sizes = [1, 32], strides = [1, 1]} : vector<8x128xf32> to vector<1x32xf32>
    %5 = arith.truncf %2 : vector<16x8xf32> to vector<16x8xbf16>
    %cst = arith.constant dense<0.000000e+00> : vector<16x8xf32>
    %6 = tpu.matmul %0, %5, %cst {dimension_numbers = #tpu.dot_dimension_numbers<[1], [0], [0], [1], [0, 0, 1, 1], [], []>} : vector<16x16xbf16>, vector<16x8xbf16>, vector<16x8xf32> -> vector<16x8xf32>
    %7 = arith.truncf %6 : vector<16x8xf32> to vector<16x8xbf16>
    %cst_7 = arith.constant dense<0.000000e+00> : vector<16x32xf32>
    %8 = tpu.matmul %7, %3, %cst_7 {dimension_numbers = #tpu.dot_dimension_numbers<[1], [0], [0], [1], [0, 0, 1, 1], [], []>} : vector<16x8xbf16>, vector<8x32xbf16>, vector<16x32xf32> -> vector<16x32xf32>
    %9 = vector.broadcast %4 : vector<1x32xf32> to vector<16x32xf32>
    %10 = arith.addf %8, %9 : vector<16x32xf32>
    %cst_8 = arith.constant 0.000000e+00 : f32
    %11 = vector.broadcast %cst_8 : f32 to vector<16x32xf32>
    %12 = arith.maximumf %10, %11 : vector<16x32xf32>
    %c0_9 = arith.constant 0 : index
    %c0_10 = arith.constant 0 : index
    %13 = vector.load %arg4[%c0_9, %c0_10] : memref<128x32xbf16, #tpu.memory_space<vmem>>, vector<32x32xbf16>
    %14 = vector.extract_strided_slice %1 {offsets = [1, 0], sizes = [1, 32], strides = [1, 1]} : vector<8x128xf32> to vector<1x32xf32>
    %15 = arith.truncf %12 : vector<16x32xf32> to vector<16x32xbf16>
    %cst_11 = arith.constant dense<0.000000e+00> : vector<16x32xf32>
    %16 = tpu.matmul %15, %13, %cst_11 {dimension_numbers = #tpu.dot_dimension_numbers<[1], [0], [0], [1], [0, 0, 1, 1], [], []>} : vector<16x32xbf16>, vector<32x32xbf16>, vector<16x32xf32> -> vector<16x32xf32>
    %17 = arith.truncf %16 : vector<16x32xf32> to vector<16x32xbf16>
    %cst_12 = arith.constant dense<0.000000e+00> : vector<16x32xf32>
    %18 = tpu.matmul %0, %17, %cst_12 {dimension_numbers = #tpu.dot_dimension_numbers<[1], [0], [0], [1], [0, 0, 1, 1], [], []>} : vector<16x16xbf16>, vector<16x32xbf16>, vector<16x32xf32> -> vector<16x32xf32>
    %19 = vector.broadcast %14 : vector<1x32xf32> to vector<16x32xf32>
    %20 = arith.addf %18, %19 : vector<16x32xf32>
    %cst_13 = arith.constant 0.000000e+00 : f32
    %21 = vector.broadcast %cst_13 : f32 to vector<16x32xf32>
    %22 = arith.maximumf %20, %21 : vector<16x32xf32>
    %c32 = arith.constant 32 : index
    %c0_14 = arith.constant 0 : index
    %23 = vector.load %arg4[%c32, %c0_14] : memref<128x32xbf16, #tpu.memory_space<vmem>>, vector<32x32xbf16>
    %24 = vector.extract_strided_slice %1 {offsets = [2, 0], sizes = [1, 32], strides = [1, 1]} : vector<8x128xf32> to vector<1x32xf32>
    %25 = arith.truncf %22 : vector<16x32xf32> to vector<16x32xbf16>
    %cst_15 = arith.constant dense<0.000000e+00> : vector<16x32xf32>
    %26 = tpu.matmul %25, %23, %cst_15 {dimension_numbers = #tpu.dot_dimension_numbers<[1], [0], [0], [1], [0, 0, 1, 1], [], []>} : vector<16x32xbf16>, vector<32x32xbf16>, vector<16x32xf32> -> vector<16x32xf32>
    %27 = arith.truncf %26 : vector<16x32xf32> to vector<16x32xbf16>
    %cst_16 = arith.constant dense<0.000000e+00> : vector<16x32xf32>
    %28 = tpu.matmul %0, %27, %cst_16 {dimension_numbers = #tpu.dot_dimension_numbers<[1], [0], [0], [1], [0, 0, 1, 1], [], []>} : vector<16x16xbf16>, vector<16x32xbf16>, vector<16x32xf32> -> vector<16x32xf32>
    %29 = vector.broadcast %24 : vector<1x32xf32> to vector<16x32xf32>
    %30 = arith.addf %28, %29 : vector<16x32xf32>
    %cst_17 = arith.constant 0.000000e+00 : f32
    %31 = vector.broadcast %cst_17 : f32 to vector<16x32xf32>
    %32 = arith.maximumf %30, %31 : vector<16x32xf32>
    %c64 = arith.constant 64 : index
    %c0_18 = arith.constant 0 : index
    %33 = vector.load %arg4[%c64, %c0_18] : memref<128x32xbf16, #tpu.memory_space<vmem>>, vector<32x32xbf16>
    %34 = vector.extract_strided_slice %1 {offsets = [3, 0], sizes = [1, 32], strides = [1, 1]} : vector<8x128xf32> to vector<1x32xf32>
    %35 = arith.truncf %32 : vector<16x32xf32> to vector<16x32xbf16>
    %cst_19 = arith.constant dense<0.000000e+00> : vector<16x32xf32>
    %36 = tpu.matmul %35, %33, %cst_19 {dimension_numbers = #tpu.dot_dimension_numbers<[1], [0], [0], [1], [0, 0, 1, 1], [], []>} : vector<16x32xbf16>, vector<32x32xbf16>, vector<16x32xf32> -> vector<16x32xf32>
    %37 = arith.truncf %36 : vector<16x32xf32> to vector<16x32xbf16>
    %cst_20 = arith.constant dense<0.000000e+00> : vector<16x32xf32>
    %38 = tpu.matmul %0, %37, %cst_20 {dimension_numbers = #tpu.dot_dimension_numbers<[1], [0], [0], [1], [0, 0, 1, 1], [], []>} : vector<16x16xbf16>, vector<16x32xbf16>, vector<16x32xf32> -> vector<16x32xf32>
    %39 = vector.broadcast %34 : vector<1x32xf32> to vector<16x32xf32>
    %40 = arith.addf %38, %39 : vector<16x32xf32>
    %cst_21 = arith.constant 0.000000e+00 : f32
    %41 = vector.broadcast %cst_21 : f32 to vector<16x32xf32>
    %42 = arith.maximumf %40, %41 : vector<16x32xf32>
    %c96 = arith.constant 96 : index
    %c0_22 = arith.constant 0 : index
    %43 = vector.load %arg4[%c96, %c0_22] : memref<128x32xbf16, #tpu.memory_space<vmem>>, vector<32x32xbf16>
    %44 = vector.extract_strided_slice %1 {offsets = [4, 0], sizes = [1, 32], strides = [1, 1]} : vector<8x128xf32> to vector<1x32xf32>
    %45 = arith.truncf %42 : vector<16x32xf32> to vector<16x32xbf16>
    %cst_23 = arith.constant dense<0.000000e+00> : vector<16x32xf32>
    %46 = tpu.matmul %45, %43, %cst_23 {dimension_numbers = #tpu.dot_dimension_numbers<[1], [0], [0], [1], [0, 0, 1, 1], [], []>} : vector<16x32xbf16>, vector<32x32xbf16>, vector<16x32xf32> -> vector<16x32xf32>
    %47 = arith.truncf %46 : vector<16x32xf32> to vector<16x32xbf16>
    %cst_24 = arith.constant dense<0.000000e+00> : vector<16x32xf32>
    %48 = tpu.matmul %0, %47, %cst_24 {dimension_numbers = #tpu.dot_dimension_numbers<[1], [0], [0], [1], [0, 0, 1, 1], [], []>} : vector<16x16xbf16>, vector<16x32xbf16>, vector<16x32xf32> -> vector<16x32xf32>
    %49 = vector.broadcast %44 : vector<1x32xf32> to vector<16x32xf32>
    %50 = arith.addf %48, %49 : vector<16x32xf32>
    %cst_25 = arith.constant 0.000000e+00 : f32
    %51 = vector.broadcast %cst_25 : f32 to vector<16x32xf32>
    %52 = arith.maximumf %50, %51 : vector<16x32xf32>
    %c0_26 = arith.constant 0 : index
    %c0_27 = arith.constant 0 : index
    %53 = vector.load %arg5[%c0_26, %c0_27] : memref<32x128xbf16, #tpu.memory_space<vmem>>, vector<32x128xbf16>
    %54 = vector.extract_strided_slice %1 {offsets = [5, 0], sizes = [1, 128], strides = [1, 1]} : vector<8x128xf32> to vector<1x128xf32>
    %55 = arith.truncf %52 : vector<16x32xf32> to vector<16x32xbf16>
    %cst_28 = arith.constant dense<0.000000e+00> : vector<16x32xf32>
    %56 = tpu.matmul %0, %55, %cst_28 {dimension_numbers = #tpu.dot_dimension_numbers<[1], [0], [0], [1], [0, 0, 1, 1], [], []>} : vector<16x16xbf16>, vector<16x32xbf16>, vector<16x32xf32> -> vector<16x32xf32>
    %57 = arith.truncf %56 : vector<16x32xf32> to vector<16x32xbf16>
    %cst_29 = arith.constant dense<0.000000e+00> : vector<16x128xf32>
    %58 = tpu.matmul %57, %53, %cst_29 {dimension_numbers = #tpu.dot_dimension_numbers<[1], [0], [0], [1], [0, 0, 1, 1], [], []>} : vector<16x32xbf16>, vector<32x128xbf16>, vector<16x128xf32> -> vector<16x128xf32>
    %59 = vector.broadcast %54 : vector<1x128xf32> to vector<16x128xf32>
    %60 = arith.addf %58, %59 : vector<16x128xf32>
    %61 = vector.extract_strided_slice %1 {offsets = [6, 0], sizes = [1, 128], strides = [1, 1]} : vector<8x128xf32> to vector<1x128xf32>
    %62 = vector.broadcast %61 : vector<1x128xf32> to vector<16x128xf32>
    %63 = arith.mulf %60, %62 : vector<16x128xf32>
    %cst_30 = arith.constant dense<0.000000e+00> : vector<16xf32>
    %64 = vector.multi_reduction <add>, %63, %cst_30 [1] : vector<16x128xf32> to vector<16xf32>
    %65 = vector.shape_cast %64 : vector<16xf32> to vector<16x1xf32>
    %66 = vector.extract_strided_slice %1 {offsets = [7, 0], sizes = [1, 1], strides = [1, 1]} : vector<8x128xf32> to vector<1x1xf32>
    %67 = vector.broadcast %66 : vector<1x1xf32> to vector<16x1xf32>
    %68 = arith.addf %65, %67 : vector<16x1xf32>
    %69 = tpu.iota {dimensions = array<i32: 1>} : vector<16x128xi32>
    %c16_i32 = arith.constant 16 : i32
    %70 = vector.broadcast %c16_i32 : i32 to vector<16x128xi32>
    %71 = arith.cmpi slt, %69, %70 : vector<16x128xi32>
    %72 = vector.shape_cast %68 : vector<16x1xf32> to vector<16x1xf32>
    %73 = vector.broadcast %72 : vector<16x1xf32> to vector<16x128xf32>
    %74 = arith.select %71, %60, %73 : vector<16x128xi1>, vector<16x128xf32>
    %c0_31 = arith.constant 0 : index
    %c0_32 = arith.constant 0 : index
    %75 = vector.load %arg7[%c0_31, %c0_32] : memref<16x128xf32, #tpu.memory_space<vmem>>, vector<16x128xf32>
    tpu.vector_store %arg7[%c0_31, %c0_32], %74 {strides = array<i32>} : memref<16x128xf32, #tpu.memory_space<vmem>>, vector<16x128xf32>,
    return
  }
  func.func @transform_0(%arg0: i32) -> (i32, i32) {
    %c0_i32 = arith.constant 0 : i32
    %c0_i32_0 = arith.constant 0 : i32
    %c0_i32_1 = arith.constant 0 : i32
    return %c0_i32, %c0_i32_0 : i32, i32
  }
  func.func @transform_1(%arg0: i32) -> (i32, i32) {
    %c0_i32 = arith.constant 0 : i32
    %c0_i32_0 = arith.constant 0 : i32
    %c0_i32_1 = arith.constant 0 : i32
    return %c0_i32, %c0_i32_0 : i32, i32
  }
  func.func @transform_2(%arg0: i32) -> (i32, i32) {
    %c0_i32 = arith.constant 0 : i32
    %c0_i32_0 = arith.constant 0 : i32
    %c0_i32_1 = arith.constant 0 : i32
    return %c0_i32, %c0_i32_0 : i32, i32
  }
  func.func @transform_3(%arg0: i32) -> (i32, i32) {
    %c0_i32 = arith.constant 0 : i32
    %c0_i32_0 = arith.constant 0 : i32
    %c0_i32_1 = arith.constant 0 : i32
    return %c0_i32, %c0_i32_0 : i32, i32
  }
  func.func @transform_4(%arg0: i32) -> (i32, i32) {
    %c0_i32 = arith.constant 0 : i32
    %c0_i32_0 = arith.constant 0 : i32
    %c0_i32_1 = arith.constant 0 : i32
    return %c0_i32, %c0_i32_0 : i32, i32
  }
  func.func @transform_5(%arg0: i32) -> (i32, i32) {
    %c0_i32 = arith.constant 0 : i32
    %c0_i32_0 = arith.constant 0 : i32
    %c0_i32_1 = arith.constant 0 : i32
    return %c0_i32, %c0_i32_0 : i32, i32
  }
  func.func @transform_6(%arg0: i32) -> (i32, i32) {
    %c0_i32 = arith.constant 0 : i32
    %c0_i32_0 = arith.constant 0 : i32
    %c0_i32_1 = arith.constant 0 : i32
    return %c0_i32, %c0_i32_0 : i32, i32
  }
}

</mosaic_0001>

<llo_original>
// kernel: tpu_custom_call.1
$region0: #{tpu_custom_call.1}
  #allocation0 [shape = 'u32[]', space=smem, size = 0x4, offset = 0x4, fixed_abs, tag = 'smem constant byte address 0x4 - core index']
  #allocation1 [shape = 'u32[72,128]{1,0:T(1,128)}', space=vmem, size = 0x9000, scoped, tag = 'internal scratch']
  %s0 = inlined_call_operand.vmem [shape: bf16[16,16], index: 0, kind: input, shape index: {}]
  %s1 = inlined_call_operand.vmem [shape: f32[16,8], index: 1, kind: input, shape index: {}]
  %s2 = inlined_call_operand.vmem [shape: bf16[8,32], index: 2, kind: input, shape index: {}]
  %s3 = inlined_call_operand.vmem [shape: bf16[128,32], index: 3, kind: input, shape index: {}]
  %s4 = inlined_call_operand.vmem [shape: bf16[32,128], index: 4, kind: input, shape index: {}]
  %s5 = inlined_call_operand.vmem [shape: f32[8,128], index: 5, kind: input, shape index: {}]
  %s6 = inlined_call_operand.hbm [shape: f32[16,128], index: 6, kind: output, shape index: {}]
  %s7 = sld [smem:[#allocation0]]
  $region34: #{tpu_custom_call.1} parent=0
    _
  %s9 = ssub.s32 1, %s7
  %s10 = scalar_select 0, %s9, %s7
  $region1: #{tpu_custom_call.1} parent=0
    #allocation2 [shape = 'u8[8192]{0}', space=vmem, size = 0x2000, scoped, tag = 'output window, operand 0, single buffered']
    #allocation3 [shape = 's32[1]{0}', space=sflag, size = 0x4, scoped, tag = 'scoped memory for tpu_custom_call.1']
    %11 = vsyncpa [#allocation3], 0
    // Predicated region
    $region2: #{tpu_custom_call.1} parent=1 // pred_check
      _
    $region3: #{tpu_custom_call.1} parent=1 // pred_check_branch
      %13 = sbr.rel (0) target = $region5
    $region4: #{tpu_custom_call.1} parent=1 // pred_region
      _
    $region5: #{tpu_custom_call.1} parent=1 // pred_fallthru
      _
    // Predicated region
    $region6: #{tpu_custom_call.1} parent=1 // pred_check
      _
    $region7: #{tpu_custom_call.1} parent=1 // pred_check_branch
      %15 = sbr.rel (0) target = $region9
    $region8: #{tpu_custom_call.1} parent=1 // pred_region
      _
    $region9: #{tpu_custom_call.1} parent=1 // pred_fallthru
      _
    // Predicated region
    $region10: #{tpu_custom_call.1} parent=1 // pred_check
      _
    $region11: #{tpu_custom_call.1} parent=1 // pred_check_branch
      %17 = sbr.rel (0) target = $region13
    $region12: #{tpu_custom_call.1} parent=1 // pred_region
      _
    $region13: #{tpu_custom_call.1} parent=1 // pred_fallthru
      _
    // Predicated region
    $region14: #{tpu_custom_call.1} parent=1 // pred_check
      _
    $region15: #{tpu_custom_call.1} parent=1 // pred_check_branch
      %19 = sbr.rel (0) target = $region17
    $region16: #{tpu_custom_call.1} parent=1 // pred_region
      _
    $region17: #{tpu_custom_call.1} parent=1 // pred_fallthru
      _
    // Predicated region
    $region18: #{tpu_custom_call.1} parent=1 // pred_check
      _
    $region19: #{tpu_custom_call.1} parent=1 // pred_check_branch
      %21 = sbr.rel (0) target = $region21
    $region20: #{tpu_custom_call.1} parent=1 // pred_region
      _
    $region21: #{tpu_custom_call.1} parent=1 // pred_fallthru
      _
    // Predicated region
    $region22: #{tpu_custom_call.1} parent=1 // pred_check
      _
    $region23: #{tpu_custom_call.1} parent=1 // pred_check_branch
      %23 = sbr.rel (0) target = $region25
    $region24: #{tpu_custom_call.1} parent=1 // pred_region
      _
    $region25: #{tpu_custom_call.1} parent=1 // pred_fallthru
      _
    %v25 = vld [vmem:[%s0] sm:$0xf]
    %v26 = vld [vmem:[%s0 + $0x4] sm:$0xf]
    %v27 = vld [vmem:[%s5] sm:$0xff]
    %v28 = vld [vmem:[%s1] sm:$0xff]
    %v29 = vld [vmem:[%s1 + $0x8] sm:$0xff]
    %v30 = vld [vmem:[%s2] sm:$0xf]
    %v31 = vpack.c.bf16 %v29, %v28
    %v34 = vunpack.c.l.b16 %v25
    %v35 = vunpack.c.l.b16 %v26
    %v36 = vpack.c.b16 %v35, %v34
    %vm37 = vcmask 130048
    %v39 = vsel %vm37, %v36, 0
    %41 = vmatpush.bf16.msra.mxu0 0
    %42 = vmatpush.bf16.msra.mxu0 0
    %43 = vmatpush.bf16.msra.mxu0 0
    %44 = vmatpush.bf16.msra.mxu0 0
    %45 = vmatpush.bf16.msra.mxu0 0
    %46 = vmatpush.bf16.msra.mxu0 0
    %47 = vmatpush.bf16.msra.mxu0 0
    %48 = vmatpush.bf16.msra.mxu0 %v31
    %49 = vmatmul.bf16.gmra.mxu0 %v39
    %v50 = vpop.f32.mrf.mxu0
    %v51 = vadd.f32 0.0, %v50
    %v52 = vpop.f32.mrf.mxu0
    %v53 = vadd.f32 0.0, %v52
    %54 = vdwg.mxu0
    %v55 = vpack.c.bf16 %v53, %v51
    %v56 = vperm.slane %v27, 0
    %vm57 = vcmask 64512
    %v59 = vsel %vm57, %v55, 0
    %vm61 = vcmask 1043456
    %v63 = vsel %vm61, %v30, 0
    %65 = vmatpush.bf16.msra.mxu0 0
    %66 = vmatpush.bf16.msra.mxu0 0
    %67 = vmatpush.bf16.msra.mxu0 0
    %68 = vmatpush.bf16.msra.mxu0 0
    %69 = vmatpush.bf16.msra.mxu0 0
    %70 = vmatpush.bf16.msra.mxu0 0
    %71 = vmatpush.bf16.msra.mxu0 0
    %72 = vmatpush.bf16.msra.mxu0 %v63
    %73 = vmatmul.bf16.gmra.mxu0 %v59
    %v74 = vpop.f32.mrf.mxu0
    %v75 = vadd.f32 %v56, %v74
    %v76 = vpop.f32.mrf.mxu0
    %v77 = vadd.f32 %v56, %v76
    %78 = vdwg.mxu0
    %v79 = vmax.f32 %v75, 0.0
    %v80 = vmax.f32 %v77, 0.0
    %v81 = vld [vmem:[%s3] sm:$0xf]
    %v82 = vld [vmem:[%s3 + $0x4] sm:$0xf]
    %v83 = vld [vmem:[%s3 + $0x8] sm:$0xf]
    %v84 = vld [vmem:[%s3 + $0xc] sm:$0xf]
    %v85 = vpack.c.bf16 %v80, %v79
    %v90 = vunpack.c.l.b16 %v81
    %v91 = vunpack.c.l.b16 %v82
    %v92 = vunpack.c.l.b16 %v83
    %v93 = vunpack.c.l.b16 %v84
    %v94 = vpack.c.b16 %v91, %v90
    %v95 = vpack.c.b16 %v93, %v92
    %vm98 = vcmask 261120
    %v100 = vsel %vm98, %v85, 0
    %102 = vmatpush.bf16.msra.mxu0 0
    %103 = vmatpush.bf16.msra.mxu0 0
    %104 = vmatpush.bf16.msra.mxu0 0
    %105 = vmatpush.bf16.msra.mxu0 0
    %106 = vmatpush.bf16.msra.mxu0 0
    %107 = vmatpush.bf16.msra.mxu0 0
    %108 = vmatpush.bf16.msra.mxu0 %v95
    %109 = vmatpush.bf16.msra.mxu0 %v94
    %110 = vmatmul.bf16.gmra.mxu0 %v100
    %v111 = vpop.f32.mrf.mxu0
    %v112 = vadd.f32 0.0, %v111
    %v113 = vpop.f32.mrf.mxu0
    %v114 = vadd.f32 0.0, %v113
    %115 = vdwg.mxu0
    %v116 = vpack.c.bf16 %v114, %v112
    %v117 = vperm.slane %v27, 1
    %118 = vmatpush.bf16.msra.mxu0 0
    %119 = vmatpush.bf16.msra.mxu0 0
    %120 = vmatpush.bf16.msra.mxu0 0
    %121 = vmatpush.bf16.msra.mxu0 0
    %122 = vmatpush.bf16.msra.mxu0 0
    %123 = vmatpush.bf16.msra.mxu0 0
    %124 = vmatpush.bf16.msra.mxu0 0
    %125 = vmatpush.bf16.msra.mxu0 %v116
    %126 = vmatmul.bf16.gmra.mxu0 %v39
    %v127 = vpop.f32.mrf.mxu0
    %v128 = vadd.f32 %v117, %v127
    %v129 = vpop.f32.mrf.mxu0
    %v130 = vadd.f32 %v117, %v129
    %131 = vdwg.mxu0
    %v132 = vmax.f32 %v128, 0.0
    %v133 = vmax.f32 %v130, 0.0
    %v134 = vld [vmem:[%s3 + $0x10] sm:$0xf]
    %v135 = vld [vmem:[%s3 + $0x14] sm:$0xf]
    %v136 = vld [vmem:[%s3 + $0x18] sm:$0xf]
    %v137 = vld [vmem:[%s3 + $0x1c] sm:$0xf]
    %v138 = vpack.c.bf16 %v133, %v132
    %v143 = vunpack.c.l.b16 %v134
    %v144 = vunpack.c.l.b16 %v135
    %v145 = vunpack.c.l.b16 %v136
    %v146 = vunpack.c.l.b16 %v137
    %v147 = vpack.c.b16 %v144, %v143
    %v148 = vpack.c.b16 %v146, %v145
    %v152 = vsel %vm98, %v138, 0
    %154 = vmatpush.bf16.msra.mxu0 0
    %155 = vmatpush.bf16.msra.mxu0 0
    %156 = vmatpush.bf16.msra.mxu0 0
    %157 = vmatpush.bf16.msra.mxu0 0
    %158 = vmatpush.bf16.msra.mxu0 0
    %159 = vmatpush.bf16.msra.mxu0 0
    %160 = vmatpush.bf16.msra.mxu0 %v148
    %161 = vmatpush.bf16.msra.mxu0 %v147
    %162 = vmatmul.bf16.gmra.mxu0 %v152
    %v163 = vpop.f32.mrf.mxu0
    %v164 = vadd.f32 0.0, %v163
    %v165 = vpop.f32.mrf.mxu0
    %v166 = vadd.f32 0.0, %v165
    %167 = vdwg.mxu0
    %v168 = vpack.c.bf16 %v166, %v164
    %v169 = vperm.slane %v27, 2
    %170 = vmatpush.bf16.msra.mxu0 0
    %171 = vmatpush.bf16.msra.mxu0 0
    %172 = vmatpush.bf16.msra.mxu0 0
    %173 = vmatpush.bf16.msra.mxu0 0
    %174 = vmatpush.bf16.msra.mxu0 0
    %175 = vmatpush.bf16.msra.mxu0 0
    %176 = vmatpush.bf16.msra.mxu0 0
    %177 = vmatpush.bf16.msra.mxu0 %v168
    %178 = vmatmul.bf16.gmra.mxu0 %v39
    %v179 = vpop.f32.mrf.mxu0
    %v180 = vadd.f32 %v169, %v179
    %v181 = vpop.f32.mrf.mxu0
    %v182 = vadd.f32 %v169, %v181
    %183 = vdwg.mxu0
    %v184 = vmax.f32 %v180, 0.0
    %v185 = vmax.f32 %v182, 0.0
    %v186 = vld [vmem:[%s3 + $0x20] sm:$0xf]
    %v187 = vld [vmem:[%s3 + $0x24] sm:$0xf]
    %v188 = vld [vmem:[%s3 + $0x28] sm:$0xf]
    %v189 = vld [vmem:[%s3 + $0x2c] sm:$0xf]
    %v190 = vpack.c.bf16 %v185, %v184
    %v195 = vunpack.c.l.b16 %v186
    %v196 = vunpack.c.l.b16 %v187
    %v197 = vunpack.c.l.b16 %v188
    %v198 = vunpack.c.l.b16 %v189
    %v199 = vpack.c.b16 %v196, %v195
    %v200 = vpack.c.b16 %v198, %v197
    %v204 = vsel %vm98, %v190, 0
    %206 = vmatpush.bf16.msra.mxu0 0
    %207 = vmatpush.bf16.msra.mxu0 0
    %208 = vmatpush.bf16.msra.mxu0 0
    %209 = vmatpush.bf16.msra.mxu0 0
    %210 = vmatpush.bf16.msra.mxu0 0
    %211 = vmatpush.bf16.msra.mxu0 0
    %212 = vmatpush.bf16.msra.mxu0 %v200
    %213 = vmatpush.bf16.msra.mxu0 %v199
    %214 = vmatmul.bf16.gmra.mxu0 %v204
    %v215 = vpop.f32.mrf.mxu0
    %v216 = vadd.f32 0.0, %v215
    %v217 = vpop.f32.mrf.mxu0
    %v218 = vadd.f32 0.0, %v217
    %219 = vdwg.mxu0
    %v220 = vpack.c.bf16 %v218, %v216
    %v221 = vperm.slane %v27, 3
    %222 = vmatpush.bf16.msra.mxu0 0
    %223 = vmatpush.bf16.msra.mxu0 0
    %224 = vmatpush.bf16.msra.mxu0 0
    %225 = vmatpush.bf16.msra.mxu0 0
    %226 = vmatpush.bf16.msra.mxu0 0
    %227 = vmatpush.bf16.msra.mxu0 0
    %228 = vmatpush.bf16.msra.mxu0 0
    %229 = vmatpush.bf16.msra.mxu0 %v220
    %230 = vmatmul.bf16.gmra.mxu0 %v39
    %v231 = vpop.f32.mrf.mxu0
    %v232 = vadd.f32 %v221, %v231
    %v233 = vpop.f32.mrf.mxu0
    %v234 = vadd.f32 %v221, %v233
    %235 = vdwg.mxu0
    %v236 = vmax.f32 %v232, 0.0
    %v237 = vmax.f32 %v234, 0.0
    %v238 = vld [vmem:[%s3 + $0x30] sm:$0xf]
    %v239 = vld [vmem:[%s3 + $0x34] sm:$0xf]
    %v240 = vld [vmem:[%s3 + $0x38] sm:$0xf]
    %v241 = vld [vmem:[%s3 + $0x3c] sm:$0xf]
    %v242 = vpack.c.bf16 %v237, %v236
    %v247 = vunpack.c.l.b16 %v238
    %v248 = vunpack.c.l.b16 %v239
    %v249 = vunpack.c.l.b16 %v240
    %v250 = vunpack.c.l.b16 %v241
    %v251 = vpack.c.b16 %v248, %v247
    %v252 = vpack.c.b16 %v250, %v249
    %v256 = vsel %vm98, %v242, 0
    %258 = vmatpush.bf16.msra.mxu0 0
    %259 = vmatpush.bf16.msra.mxu0 0
    %260 = vmatpush.bf16.msra.mxu0 0
    %261 = vmatpush.bf16.msra.mxu0 0
    %262 = vmatpush.bf16.msra.mxu0 0
    %263 = vmatpush.bf16.msra.mxu0 0
    %264 = vmatpush.bf16.msra.mxu0 %v252
    %265 = vmatpush.bf16.msra.mxu0 %v251
    %266 = vmatmul.bf16.gmra.mxu0 %v256
    %v267 = vpop.f32.mrf.mxu0
    %v268 = vadd.f32 0.0, %v267
    %v269 = vpop.f32.mrf.mxu0
    %v270 = vadd.f32 0.0, %v269
    %271 = vdwg.mxu0
    %v272 = vpack.c.bf16 %v270, %v268
    %v273 = vperm.slane %v27, 4
    %274 = vmatpush.bf16.msra.mxu0 0
    %275 = vmatpush.bf16.msra.mxu0 0
    %276 = vmatpush.bf16.msra.mxu0 0
    %277 = vmatpush.bf16.msra.mxu0 0
    %278 = vmatpush.bf16.msra.mxu0 0
    %279 = vmatpush.bf16.msra.mxu0 0
    %280 = vmatpush.bf16.msra.mxu0 0
    %281 = vmatpush.bf16.msra.mxu0 %v272
    %282 = vmatmul.bf16.gmra.mxu0 %v39
    %v283 = vpop.f32.mrf.mxu0
    %v284 = vadd.f32 %v273, %v283
    %v285 = vpop.f32.mrf.mxu0
    %v286 = vadd.f32 %v273, %v285
    %287 = vdwg.mxu0
    %v288 = vmax.f32 %v284, 0.0
    %v289 = vmax.f32 %v286, 0.0
    %v290 = vld [vmem:[%s4] sm:$0xf]
    %v291 = vld [vmem:[%s4 + $0x4] sm:$0xf]
    %v292 = vld [vmem:[%s4 + $0x8] sm:$0xf]
    %v293 = vld [vmem:[%s4 + $0xc] sm:$0xf]
    %v294 = vpack.c.bf16 %v289, %v288
    %295 = vmatpush.bf16.msra.mxu0 0
    %296 = vmatpush.bf16.msra.mxu0 0
    %297 = vmatpush.bf16.msra.mxu0 0
    %298 = vmatpush.bf16.msra.mxu0 0
    %299 = vmatpush.bf16.msra.mxu0 0
    %300 = vmatpush.bf16.msra.mxu0 0
    %301 = vmatpush.bf16.msra.mxu0 0
    %302 = vmatpush.bf16.msra.mxu0 %v294
    %303 = vmatmul.bf16.gmra.mxu0 %v39
    %v304 = vpop.f32.mrf.mxu0
    %v305 = vadd.f32 0.0, %v304
    %v306 = vpop.f32.mrf.mxu0
    %v307 = vadd.f32 0.0, %v306
    %308 = vdwg.mxu0
    %v309 = vpack.c.bf16 %v307, %v305
    %v310 = vperm.slane %v27, 5
    %v315 = vunpack.c.l.b16 %v290
    %v316 = vunpack.c.l.b16 %v291
    %v317 = vunpack.c.l.b16 %v292
    %v318 = vunpack.c.l.b16 %v293
    %v319 = vpack.c.b16 %v316, %v315
    %v320 = vpack.c.b16 %v318, %v317
    %v324 = vsel %vm98, %v309, 0
    %326 = vmatpush.bf16.msra.mxu0 0
    %327 = vmatpush.bf16.msra.mxu0 0
    %328 = vmatpush.bf16.msra.mxu0 0
    %329 = vmatpush.bf16.msra.mxu0 0
    %330 = vmatpush.bf16.msra.mxu0 0
    %331 = vmatpush.bf16.msra.mxu0 0
    %332 = vmatpush.bf16.msra.mxu0 %v320
    %333 = vmatpush.bf16.msra.mxu0 %v319
    %334 = vmatmul.bf16.gmra.mxu0 %v324
    %v335 = vpop.f32.mrf.mxu0
    %v336 = vadd.f32 %v310, %v335
    %v337 = vpop.f32.mrf.mxu0
    %v338 = vadd.f32 %v310, %v337
    %339 = vdwg.mxu0
    %v340 = vperm.slane %v27, 6
    %v341 = vmul.f32 %v336, %v340
    %v342 = vmul.f32 %v338, %v340
    %343 = vadd.xlane.f32.xlu0 %v341
    %v344 = vpop.xlane.xlu0 %343
    %345 = vadd.xlane.f32.xlu0 %v342
    %v346 = vpop.xlane.xlu0 %345
    %v347 = vperm.slane %v27, 7
    %v348 = vadd.f32 %v344, %v347
    %v349 = vadd.f32 %v346, %v347
    %v350 = vlaneseq
    %v351 = vand.u32 %v350, 127
    %vm352 = vcmp.lt.s32.totalorder %v351, 16
    %354 = vset.pattern.permute.xlu0 0
    %355 = vperm.xlu0 %354, %v348
    %v356 = vpop.permute.xlu0 %355
    %359 = vset.pattern.permute.xlu0 0
    %360 = vperm.xlu0 %359, %v349
    %v361 = vpop.permute.xlu0 %360
    %v363 = vsel %vm352, %v336, %v356
    %v364 = vsel %vm352, %v338, %v361
    %365 = vst [vmem:[#allocation2] sm:$0xff] %v363
    %366 = vst [vmem:[#allocation2 + $0x8] sm:$0xff] %v364
    // Predicated region
    $region26: #{tpu_custom_call.1} parent=1 // pred_check
      _
    $region27: #{tpu_custom_call.1} parent=1 // pred_check_branch
      %368 = sbr.rel (0) target = $region29
    $region28: #{tpu_custom_call.1} parent=1 // pred_region
      %370 = vsyncadd [#allocation3], 0
      %s371 = sshll.u32 [#allocation2], 4
      %s372 = int_to_ptr.vmem [resolvable:$true] %s371
      %s373 = sshll.u32 %s6, 4
      %s374 = int_to_ptr.hbm [resolvable:$true] %s373
      %379 = dma.vmem_to_hbm [thread:$0]  %s372, 256, %s374, [#allocation3], 128, 128, 8
    $region29: #{tpu_custom_call.1} parent=1 // pred_fallthru
      _
    // Predicated region
    $region30: #{tpu_custom_call.1} parent=1 // pred_check
      _
    $region31: #{tpu_custom_call.1} parent=1 // pred_check_branch
      %381 = sbr.rel (0) target = $region33
    $region32: #{tpu_custom_call.1} parent=1 // pred_region
      %383 = dma.done [#allocation3], 256
    $region33: #{tpu_custom_call.1} parent=1 // pred_fallthru
      _
    %384 = vsyncpa [#allocation3], 1

</llo_original>
